<compile_context>
chip_gen: v7x
topology: tpu7x:2x2x1
jax: 0.10.0
libtpu: 0.0.40
codegen_flags: <defaults>
</compile_context>

<pallas_src>
import functools

import jax
import jax.numpy as jnp
from jax import lax
from jax.experimental import pallas as pl
from jax.experimental.pallas import tpu as pltpu


def patch_images(images: jax.Array, patch_size: int) -> jax.Array:
    """imgs [B, C, H, W] -> patches [B, (H/p)*(W/p), p*p*C] (MAE convention)."""
    B, C, H, W = images.shape
    p = patch_size
    h, w = H // p, W // p
    x = images.reshape(B, C, h, p, w, p)
    # nchpwq -> nhwpqc
    x = jnp.transpose(x, (0, 2, 4, 3, 5, 1))
    return x.reshape(B, h * w, p * p * C)


def _mae_loss_kernel(pred_ref, tgt_ref, mask_ref, out_ref, *,
                     norm_pix_loss: bool, patch_dim: int,
                     tile_r: int, num_rows: int, needs_row_mask: bool):
    pred = pred_ref[...].astype(jnp.float32)   # (TILE_R, D)
    tgt = tgt_ref[...].astype(jnp.float32)     # (TILE_R, D)
    mask = mask_ref[...]                       # (TILE_R, 1) f32

    if norm_pix_loss:
        mean = jnp.mean(tgt, axis=-1, keepdims=True)
        centered = tgt - mean
        # torch.var default is unbiased (ddof=1)
        var = jnp.sum(centered * centered, axis=-1, keepdims=True) / (patch_dim - 1)
        tgt = centered * lax.rsqrt(var + 1e-06)

    diff = pred - tgt
    masked_sq = diff * diff * mask                        # (TILE_R, D), VPU only

    if needs_row_mask:
        # Last tile may extend past the array; select (not multiply) so that
        # out-of-bounds garbage (incl. NaN/Inf) cannot contaminate the sum.
        row0 = pl.program_id(0) * tile_r
        row_idx = row0 + lax.broadcasted_iota(jnp.int32, (tile_r, 1), 0)
        masked_sq = jnp.where(row_idx < num_rows, masked_sq, 0.0)

    partial = jnp.sum(masked_sq, axis=0, keepdims=True)   # (1, D) sublane reduce
    out_ref[...] = partial.reshape(1, 1, patch_dim)


def _row_tile(num_rows: int, row_bytes: int) -> int:
    """Pick a row-tile: multiple of 8, per-input block <= ~3 MiB so that
    2 inputs x 2 pipeline buffers fit even v5e's 16 MiB default scoped VMEM."""
    budget = 3 * 1024 * 1024
    cap = max(8, min(4096, budget // max(row_bytes, 1)))
    cap -= cap % 8
    cap = max(cap, 8)
    if num_rows <= cap:
        return max(8, -(-num_rows // 8) * 8)   # single tile, rounded up to 8
    # Prefer a divisor of num_rows so the ragged-tile mask path is not needed.
    for t in range(cap, 7, -8):
        if num_rows % t == 0:
            return t
    return cap


def mae_loss(images: jax.Array, predictions: jax.Array, masks: jax.Array,
             patch_size: int, norm_pix_loss: bool = False) -> jax.Array:
    """
    images: [B, C, H, W]
    predictions: [B, N, p*p*C]
    masks: [B, N]  (0 = keep, 1 = remove)
    returns: scalar loss
    """
    target = patch_images(images, patch_size)
    B, N, D = target.shape
    assert predictions.shape == (B, N, D)
    assert masks.shape == (B, N)

    R = B * N
    row_bytes = D * max(jnp.dtype(predictions.dtype).itemsize,
                        jnp.dtype(target.dtype).itemsize)
    tile_r = _row_tile(R, row_bytes)
    num_tiles = -(-R // tile_r)
    needs_row_mask = (num_tiles * tile_r) != R

    # Flatten to row-major [R, D]; keep native dtype, NO padding copies.
    pred2 = predictions.reshape(R, D)
    tgt2 = target.reshape(R, D)
    mask2 = masks.reshape(R, 1).astype(jnp.float32)

    kernel = functools.partial(_mae_loss_kernel,
                               norm_pix_loss=norm_pix_loss,
                               patch_dim=D,
                               tile_r=tile_r,
                               num_rows=R,
                               needs_row_mask=needs_row_mask)

    partials = pl.pallas_call(
        kernel,
        out_shape=jax.ShapeDtypeStruct((num_tiles, 1, D), jnp.float32),
        grid_spec=pltpu.PrefetchScalarGridSpec(
            num_scalar_prefetch=0,
            grid=(num_tiles,),
            in_specs=[
                pl.BlockSpec((tile_r, D), lambda t: (t, 0)),   # predictions
                pl.BlockSpec((tile_r, D), lambda t: (t, 0)),   # target patches
                pl.BlockSpec((tile_r, 1), lambda t: (t, 0)),   # masks
            ],
            out_specs=pl.BlockSpec((1, 1, D), lambda t: (t, 0, 0)),
        ),
        compiler_params=pltpu.CompilerParams(
            dimension_semantics=("parallel",),
            vmem_limit_bytes=32 * 1024 * 1024,
        ),
    )(pred2, tgt2, mask2)

    # Final tiny reduction in plain JAX: fold the per-patch 1/D mean and the
    # mask-count denominator into one scalar division.
    numerator = jnp.sum(partials, dtype=jnp.float32)
    denominator = jnp.sum(masks.astype(jnp.float32))
    return numerator / (jnp.float32(D) * denominator)


def _reference_mae_loss(images, predictions, masks, patch_size, norm_pix_loss=False):
    target = patch_images(images, patch_size).astype(jnp.float32)
    if norm_pix_loss:
        mean = target.mean(axis=-1, keepdims=True)
        var = jnp.var(target, axis=-1, keepdims=True, ddof=1)
        target = (target - mean) / (var + 1e-06) ** 0.5
    loss = (predictions.astype(jnp.float32) - target) ** 2
    loss = loss.mean(axis=-1)
    return (loss * masks).sum() / masks.sum()


if __name__ == "__main__":
    # Small shapes consistent with the module's forward.
    B, C, H, W = 2, 4, 16, 16
    patch_size = 4
    N = (H // patch_size) * (W // patch_size)       # 16 patches
    D = patch_size * patch_size * C                 # 64 values per patch

    key = jax.random.PRNGKey(0)
    k_img, k_pred, k_mask = jax.random.split(key, 3)
    images = jax.random.normal(k_img, (B, C, H, W), dtype=jnp.float32)
    predictions = jax.random.normal(k_pred, (B, N, D), dtype=jnp.float32)
    masks = (jax.random.uniform(k_mask, (B, N)) < 0.75).astype(jnp.float32)

    for norm_pix in (False, True):
        loss = mae_loss(images, predictions, masks, patch_size,
                        norm_pix_loss=norm_pix)
        loss = jax.block_until_ready(loss)
        ref = _reference_mae_loss(images, predictions, masks, patch_size,
                                  norm_pix_loss=norm_pix)
        assert jnp.allclose(loss, ref, rtol=1e-5, atol=1e-5), (norm_pix, loss, ref)

    print("KERNEL_OK")
</pallas_src>

<mosaic_0001>
module attributes {stable_mosaic.version = 11 : i64} {
  func.func @_mae_loss_kernel(%arg0: i32, %arg1: memref<32x64xf32, #tpu.memory_space<vmem>>, %arg2: memref<32x64xf32, #tpu.memory_space<vmem>>, %arg3: memref<32x1xf32, #tpu.memory_space<vmem>>, %arg4: memref<1x1x64xf32, #tpu.memory_space<vmem>>) attributes {dimension_semantics = [#tpu.dimension_semantics<parallel>], iteration_bounds = array<i64: 1>, scalar_prefetch = 0 : i64, scratch_operands = 0 : i64, tpu.core_type = #tpu.core_type<tc>, window_params = [{transform_indices = @transform_0, window_bounds = array<i64: 32, 64>}, {transform_indices = @transform_1, window_bounds = array<i64: 32, 64>}, {transform_indices = @transform_2, window_bounds = array<i64: 32, 1>}, {transform_indices = @transform_3, window_bounds = array<i64: 1, 1, 64>}]} {
    %c0 = arith.constant 0 : index
    %c0_0 = arith.constant 0 : index
    %0 = vector.load %arg1[%c0, %c0_0] : memref<32x64xf32, #tpu.memory_space<vmem>>, vector<32x64xf32>
    %c0_1 = arith.constant 0 : index
    %c0_2 = arith.constant 0 : index
    %1 = vector.load %arg2[%c0_1, %c0_2] : memref<32x64xf32, #tpu.memory_space<vmem>>, vector<32x64xf32>
    %c0_3 = arith.constant 0 : index
    %c0_4 = arith.constant 0 : index
    %2 = vector.load %arg3[%c0_3, %c0_4] : memref<32x1xf32, #tpu.memory_space<vmem>>, vector<32x1xf32>
    %3 = arith.subf %0, %1 : vector<32x64xf32>
    %4 = arith.mulf %3, %3 : vector<32x64xf32>
    %5 = vector.broadcast %2 : vector<32x1xf32> to vector<32x64xf32>
    %6 = arith.mulf %4, %5 : vector<32x64xf32>
    %cst = arith.constant dense<0.000000e+00> : vector<64xf32>
    %7 = vector.multi_reduction <add>, %6, %cst [0] : vector<32x64xf32> to vector<64xf32>
    %8 = vector.shape_cast %7 : vector<64xf32> to vector<1x64xf32>
    %9 = vector.shape_cast %8 : vector<1x64xf32> to vector<1x1x64xf32>
    %c0_5 = arith.constant 0 : index
    %c0_6 = arith.constant 0 : index
    %c0_7 = arith.constant 0 : index
    %10 = vector.load %arg4[%c0_5, %c0_6, %c0_7] : memref<1x1x64xf32, #tpu.memory_space<vmem>>, vector<1x1x64xf32>
    tpu.vector_store %arg4[%c0_5, %c0_6, %c0_7], %9 {strides = array<i32>} : memref<1x1x64xf32, #tpu.memory_space<vmem>>, vector<1x1x64xf32>,
    return
  }
  func.func @transform_0(%arg0: i32) -> (i32, i32) {
    %c0_i32 = arith.constant 0 : i32
    %c0_i32_0 = arith.constant 0 : i32
    return %arg0, %c0_i32 : i32, i32
  }
  func.func @transform_1(%arg0: i32) -> (i32, i32) {
    %c0_i32 = arith.constant 0 : i32
    %c0_i32_0 = arith.constant 0 : i32
    return %arg0, %c0_i32 : i32, i32
  }
  func.func @transform_2(%arg0: i32) -> (i32, i32) {
    %c0_i32 = arith.constant 0 : i32
    %c0_i32_0 = arith.constant 0 : i32
    return %arg0, %c0_i32 : i32, i32
  }
  func.func @transform_3(%arg0: i32) -> (i32, i32, i32) {
    %c0_i32 = arith.constant 0 : i32
    %c0_i32_0 = arith.constant 0 : i32
    %c0_i32_1 = arith.constant 0 : i32
    return %arg0, %c0_i32, %c0_i32_0 : i32, i32, i32
  }
}

</mosaic_0001>

<llo_original>
// kernel: tpu_custom_call.1
$region0: #{tpu_custom_call.1}
  #allocation0 [shape = 'u32[]', space=smem, size = 0x4, offset = 0x4, fixed_abs, tag = 'smem constant byte address 0x4 - core index']
  #allocation1 [shape = 'u32[144,128]{1,0:T(1,128)}', space=vmem, size = 0x12000, scoped, tag = 'internal scratch']
  %s0 = inlined_call_operand.vmem [shape: f32[32,64], index: 0, kind: input, shape index: {}]
  %s1 = inlined_call_operand.hbm [shape: f32[32,64], index: 1, kind: input, shape index: {}]
  %s2 = inlined_call_operand.vmem [shape: f32[32,1], index: 2, kind: input, shape index: {}]
  %s3 = inlined_call_operand.hbm [shape: f32[1,1,64], index: 3, kind: output, shape index: {}]
  %s4 = sld [smem:[#allocation0]]
  $region26: #{tpu_custom_call.1} parent=0
    _
  %s6 = ssub.s32 1, %s4
  %s7 = scalar_select 0, %s6, %s4
  $region1: #{tpu_custom_call.1} parent=0
    #allocation2 [shape = 'u8[16384]{0}', space=vmem, size = 0x4000, scoped, tag = 'input window, operand 1, single buffered']
    #allocation3 [shape = 's32[1]{0}', space=sflag, size = 0x4, scoped, tag = 'scoped memory for tpu_custom_call.1']
    #allocation4 [shape = 's32[1]{0}', space=sflag, size = 0x4, scoped, tag = 'scoped memory for tpu_custom_call.1']
    #allocation5 [shape = 'u8[512]{0}', space=vmem, size = 0x400, scoped, tag = 'output window, operand 0, single buffered']
    %8 = vsyncpa [#allocation3], 0
    %9 = vsyncpa [#allocation4], 0
    // Predicated region
    $region2: #{tpu_custom_call.1} parent=1 // pred_check
      _
    $region3: #{tpu_custom_call.1} parent=1 // pred_check_branch
      %11 = sbr.rel (0) target = $region5
    $region4: #{tpu_custom_call.1} parent=1 // pred_region
      _
    $region5: #{tpu_custom_call.1} parent=1 // pred_fallthru
      _
    // Predicated region
    $region6: #{tpu_custom_call.1} parent=1 // pred_check
      _
    $region7: #{tpu_custom_call.1} parent=1 // pred_check_branch
      %13 = sbr.rel (0) target = $region9
    $region8: #{tpu_custom_call.1} parent=1 // pred_region
      %s15 = ssub.s32 512, 512
      %16 = vsyncadd [#allocation3], %s15
      %s17 = sshll.u32 [#allocation2], 4
      %s18 = int_to_ptr.vmem [resolvable:$true] %s17
      %23 = dma.hbm_to_vmem [thread:$0]  %s1, 512, %s18, [#allocation3], 128, 128, 8
    $region9: #{tpu_custom_call.1} parent=1 // pred_fallthru
      _
    // Predicated region
    $region10: #{tpu_custom_call.1} parent=1 // pred_check
      _
    $region11: #{tpu_custom_call.1} parent=1 // pred_check_branch
      %25 = sbr.rel (0) target = $region13
    $region12: #{tpu_custom_call.1} parent=1 // pred_region
      _
    $region13: #{tpu_custom_call.1} parent=1 // pred_fallthru
      _
    // Predicated region
    $region14: #{tpu_custom_call.1} parent=1 // pred_check
      _
    $region15: #{tpu_custom_call.1} parent=1 // pred_check_branch
      %27 = sbr.rel (0) target = $region17
    $region16: #{tpu_custom_call.1} parent=1 // pred_region
      %28 = dma.done [#allocation3], 512
    $region17: #{tpu_custom_call.1} parent=1 // pred_fallthru
      _
    %v29 = vld [vmem:[%s0] sm:$0xff]
    %v30 = vld [vmem:[%s0 + $0x8] sm:$0xff]
    %v31 = vld [vmem:[%s0 + $0x10] sm:$0xff]
    %v32 = vld [vmem:[%s0 + $0x18] sm:$0xff]
    %v33 = vld [vmem:[#allocation2] sm:$0xff]
    %v34 = vld [vmem:[#allocation2 + $0x8] sm:$0xff]
    %v35 = vld [vmem:[#allocation2 + $0x10] sm:$0xff]
    %v36 = vld [vmem:[#allocation2 + $0x18] sm:$0xff]
    %v37 = vld [vmem:[%s2] sm:$0xff]
    %v38 = vld [vmem:[%s2 + $0x8] sm:$0xff]
    %v39 = vld [vmem:[%s2 + $0x10] sm:$0xff]
    %v40 = vld [vmem:[%s2 + $0x18] sm:$0xff]
    %v41 = vsub.f32 %v29, %v33
    %v42 = vsub.f32 %v30, %v34
    %v43 = vsub.f32 %v31, %v35
    %v44 = vsub.f32 %v32, %v36
    %v45 = vmul.f32 %v41, %v41
    %v46 = vmul.f32 %v42, %v42
    %v47 = vmul.f32 %v43, %v43
    %v48 = vmul.f32 %v44, %v44
    %50 = vset.pattern.permute.xlu0 0
    %51 = vperm.xlu0 %50, %v37
    %v52 = vpop.permute.xlu0 %51
    %55 = vset.pattern.permute.xlu0 0
    %56 = vperm.xlu0 %55, %v38
    %v57 = vpop.permute.xlu0 %56
    %60 = vset.pattern.permute.xlu0 0
    %61 = vperm.xlu0 %60, %v39
    %v62 = vpop.permute.xlu0 %61
    %65 = vset.pattern.permute.xlu0 0
    %66 = vperm.xlu0 %65, %v40
    %v67 = vpop.permute.xlu0 %66
    %v69 = vmul.f32 %v45, %v52
    %v70 = vmul.f32 %v46, %v57
    %v71 = vmul.f32 %v47, %v62
    %v72 = vmul.f32 %v48, %v67
    %vm73 = vcmask 523264
    %v74 = vsel %vm73, %v69, 0.0
    %v75 = vsel %vm73, %v70, 0.0
    %v76 = vadd.f32 %v74, %v75
    %v77 = vsel %vm73, %v71, 0.0
    %v78 = vadd.f32 %v76, %v77
    %v79 = vsel %vm73, %v72, 0.0
    %v80 = vadd.f32 %v78, %v79
    %v81 = vrot.slane %v80, 4
    %v82 = vadd.f32 %v80, %v81
    %v83 = vrot.slane %v82, 2
    %v84 = vadd.f32 %v82, %v83
    %v85 = vrot.slane %v84, 1
    %v86 = vadd.f32 %v84, %v85
    %vm87 = vcmask 516096
    %88 = vst.msk [vmem:[#allocation5] sm:$0x1] %vm87, %v86
    // Predicated region
    $region18: #{tpu_custom_call.1} parent=1 // pred_check
      _
    $region19: #{tpu_custom_call.1} parent=1 // pred_check_branch
      %90 = sbr.rel (0) target = $region21
    $region20: #{tpu_custom_call.1} parent=1 // pred_region
      %s92 = ssub.s32 16, 16
      %93 = vsyncadd [#allocation4], %s92
      %s95 = sshll.u32 [#allocation5], 4
      %s96 = int_to_ptr.vmem [resolvable:$true] %s95
      %98 = dma.vmem_to_hbm [thread:$0]  %s96, 16, %s3, [#allocation4]
    $region21: #{tpu_custom_call.1} parent=1 // pred_fallthru
      _
    // Predicated region
    $region22: #{tpu_custom_call.1} parent=1 // pred_check
      _
    $region23: #{tpu_custom_call.1} parent=1 // pred_check_branch
      %100 = sbr.rel (0) target = $region25
    $region24: #{tpu_custom_call.1} parent=1 // pred_region
      %101 = dma.done [#allocation4], 16
    $region25: #{tpu_custom_call.1} parent=1 // pred_fallthru
      _
    %102 = vsyncpa [#allocation3], 1
    %103 = vsyncpa [#allocation4], 1

</llo_original>
